<compile_context>
chip_gen: v7x
topology: tpu7x:2x2x1
jax: 0.10.0
libtpu: 0.0.40
codegen_flags: <defaults>
</compile_context>

<pallas_src>
import functools

import jax
import jax.numpy as jnp
from jax.experimental import pallas as pl
from jax.experimental.pallas import tpu as pltpu


def bert_self_output_kernel(h_ref, inp_ref, w_ref, b_ref, g_ref, beta_ref,
                            out_ref, *, eps):
    # h_ref/inp_ref/out_ref: (tm, H) row tile.  w_ref: (H, H) stored (in, out),
    # i.e. torch weight transposed.  b/g/beta: (1, H).
    w = w_ref[...]                                           # bf16 weights
    x = jnp.dot(h_ref[...].astype(w.dtype), w,               # bf16 x bf16 on MXU
                preferred_element_type=jnp.float32)          # f32 accumulate
    # nn.Dropout -> identity in eval mode.
    y = x + b_ref[...] + inp_ref[...]
    # LayerNorm in f32, single-pass statistics.
    mu = jnp.mean(y, axis=-1, keepdims=True)
    var = jnp.maximum(jnp.mean(y * y, axis=-1, keepdims=True) - mu * mu, 0.0)
    out = (y - mu) * jax.lax.rsqrt(var + eps) * g_ref[...] + beta_ref[...]
    out_ref[...] = out.astype(out_ref.dtype)


def _pick_tm(M, block_rows):
    """Row-tile size: multiple of 8, prefers dividing M, >=2 grid steps if possible."""
    want = max(8, (block_rows // 8) * 8)
    if M <= want:
        # Whole extent fits one tile; split in two for megacore when legal.
        if M >= 16 and M % 16 == 0:
            return M // 2
        return M                        # full-extent block is always legal
    # Prefer a multiple-of-8 divisor of M (avoids the jnp.pad HBM copies).
    tm = want
    while tm >= max(8, want // 4):
        if M % tm == 0:
            return tm
        tm -= 8
    return want                          # fall back to padding path


def bert_self_output(hidden_states, input_tensor, params, *, eps=1e-12,
                     block_rows=512, out_dtype=None):
    """LayerNorm(Linear(hidden_states) + input_tensor), row-tiled Pallas kernel."""
    B, S, H = hidden_states.shape
    M = B * S
    out_dtype = jnp.dtype(out_dtype) if out_dtype is not None else hidden_states.dtype
    h2 = hidden_states.reshape(M, H)
    i2 = input_tensor.reshape(M, H)

    w, b, g, beta = params["w"], params["b"], params["gamma"], params["beta"]
    param_bytes = sum(int(p.size) * p.dtype.itemsize for p in (w, b, g, beta))
    act_itemsize = max(h2.dtype.itemsize, i2.dtype.itemsize, out_dtype.itemsize)

    # Generation-aware VMEM ceiling (v7x has 64 MiB/TC, v5e/v6e 128 MiB).
    try:
        vmem_cap = int(pltpu.get_tpu_info().vmem_capacity_bytes)
    except Exception:  # pragma: no cover - conservative fallback
        vmem_cap = 64 << 20
    budget = vmem_cap * 3 // 4

    tm = _pick_tm(M, block_rows)
    # Shrink until resident params + double-buffered (2 in + 1 out) tiles fit.
    while tm > 8 and (2 * param_bytes + 6 * tm * H * act_itemsize + (4 << 20)) > budget:
        tm = max(8, ((tm // 2) // 8) * 8)

    m_pad = pl.cdiv(M, tm) * tm
    if m_pad != M:
        # TODO(synk): ragged tail handled by padding; for very large inputs a
        # tm dividing M avoids this extra HBM copy of both activation tensors.
        pad = m_pad - M
        h2 = jnp.pad(h2, ((0, pad), (0, 0)))
        i2 = jnp.pad(i2, ((0, pad), (0, 0)))

    tile_bytes = 3 * 2 * tm * H * act_itemsize
    vmem_limit = min(int(2 * param_bytes + tile_bytes + (8 << 20)), int(budget))

    def const_spec(arr):
        return pl.BlockSpec(arr.shape, lambda i: (0,) * arr.ndim)

    grid = (m_pad // tm,)
    in_specs = [
        pl.BlockSpec((tm, H), lambda i: (i, 0)),     # hidden_states row tile
        pl.BlockSpec((tm, H), lambda i: (i, 0)),     # residual row tile
        const_spec(w), const_spec(b), const_spec(g), const_spec(beta),
    ]
    out_spec = pl.BlockSpec((tm, H), lambda i: (i, 0))

    kernel = functools.partial(bert_self_output_kernel, eps=eps)
    out = pl.pallas_call(
        kernel,
        out_shape=jax.ShapeDtypeStruct((m_pad, H), out_dtype),
        grid_spec=pltpu.PrefetchScalarGridSpec(
            num_scalar_prefetch=0,
            grid=grid,
            in_specs=in_specs,
            out_specs=out_spec,
        ),
        compiler_params=pltpu.CompilerParams(
            dimension_semantics=("parallel",),
            vmem_limit_bytes=vmem_limit,
        ),
    )(h2, i2, w, b, g, beta)

    return out[:M].reshape(B, S, H)


def init_params(key, hidden_size, *, weight_dtype=jnp.bfloat16):
    H = hidden_size
    k_w, k_g, k_b = jax.random.split(key, 3)
    return {
        # Linear weight stored as (in, out) == torch (out, in).T
        "w": (0.02 * jax.random.normal(k_w, (H, H), jnp.float32)).astype(weight_dtype),
        "b": jnp.zeros((1, H), jnp.float32),
        "gamma": (1.0 + 0.05 * jax.random.normal(k_g, (1, H), jnp.float32)),
        "beta": (0.05 * jax.random.normal(k_b, (1, H), jnp.float32)),
    }


def _reference(hidden_states, input_tensor, params, eps):
    # Pure-JAX f32 reference of BertSelfOutput.forward (eval mode).
    x = jnp.einsum("bsh,hk->bsk", hidden_states,
                   params["w"].astype(jnp.float32),
                   precision=jax.lax.Precision.HIGHEST) + params["b"]
    y = x + input_tensor
    mu = jnp.mean(y, axis=-1, keepdims=True)
    var = jnp.mean((y - mu) ** 2, axis=-1, keepdims=True)
    return (y - mu) * jax.lax.rsqrt(var + eps) * params["gamma"] + params["beta"]


if __name__ == "__main__":
    # Small, lane-aligned config (H multiple of 128).
    B, S, H = 2, 64, 128
    EPS = 1e-12

    root = jax.random.PRNGKey(0)
    k_h, k_i, k_p = jax.random.split(root, 3)
    hidden_states = jax.random.normal(k_h, (B, S, H), jnp.float32)
    input_tensor = jax.random.normal(k_i, (B, S, H), jnp.float32)
    params = init_params(k_p, H)   # bf16 weights (bf16-native MXU path)
    # TODO(synk): nn.Dropout is treated as identity (eval mode); training-mode RNG
    # dropout is not implemented.

    out = bert_self_output(hidden_states, input_tensor, params, eps=EPS)
    jax.block_until_ready(out)

    ref = _reference(hidden_states, input_tensor, params, EPS)
    assert out.shape == (B, S, H)
    max_diff = float(jnp.max(jnp.abs(out - ref)))
    assert bool(jnp.allclose(out, ref, atol=2e-2, rtol=2e-2)), (
        f"max abs diff {max_diff}")
    print("KERNEL_OK")
</pallas_src>

<mosaic_0001>
module attributes {stable_mosaic.version = 11 : i64} {
  func.func @bert_self_output_kernel(%arg0: i32, %arg1: memref<64x128xf32, #tpu.memory_space<vmem>>, %arg2: memref<64x128xf32, #tpu.memory_space<vmem>>, %arg3: memref<128x128xbf16, #tpu.memory_space<vmem>>, %arg4: memref<1x128xf32, #tpu.memory_space<vmem>>, %arg5: memref<1x128xf32, #tpu.memory_space<vmem>>, %arg6: memref<1x128xf32, #tpu.memory_space<vmem>>, %arg7: memref<64x128xf32, #tpu.memory_space<vmem>>) attributes {dimension_semantics = [#tpu.dimension_semantics<parallel>], iteration_bounds = array<i64: 2>, scalar_prefetch = 0 : i64, scratch_operands = 0 : i64, tpu.core_type = #tpu.core_type<tc>, window_params = [{transform_indices = @transform_0, window_bounds = array<i64: 64, 128>}, {transform_indices = @transform_1, window_bounds = array<i64: 64, 128>}, {pipeline_mode = #tpu.pipeline_mode<synchronous>, transform_indices = @transform_2, window_bounds = array<i64: 128, 128>}, {pipeline_mode = #tpu.pipeline_mode<synchronous>, transform_indices = @transform_3, window_bounds = array<i64: 1, 128>}, {pipeline_mode = #tpu.pipeline_mode<synchronous>, transform_indices = @transform_4, window_bounds = array<i64: 1, 128>}, {pipeline_mode = #tpu.pipeline_mode<synchronous>, transform_indices = @transform_5, window_bounds = array<i64: 1, 128>}, {transform_indices = @transform_6, window_bounds = array<i64: 64, 128>}]} {
    %c0 = arith.constant 0 : index
    %c0_0 = arith.constant 0 : index
    %0 = vector.load %arg3[%c0, %c0_0] : memref<128x128xbf16, #tpu.memory_space<vmem>>, vector<128x128xbf16>
    %c0_1 = arith.constant 0 : index
    %c0_2 = arith.constant 0 : index
    %1 = vector.load %arg1[%c0_1, %c0_2] : memref<64x128xf32, #tpu.memory_space<vmem>>, vector<64x128xf32>
    %2 = arith.truncf %1 : vector<64x128xf32> to vector<64x128xbf16>
    %cst = arith.constant dense<0.000000e+00> : vector<64x128xf32>
    %3 = tpu.matmul %2, %0, %cst {dimension_numbers = #tpu.dot_dimension_numbers<[1], [0], [0], [1], [0, 0, 1, 1], [], []>} : vector<64x128xbf16>, vector<128x128xbf16>, vector<64x128xf32> -> vector<64x128xf32>
    %c0_3 = arith.constant 0 : index
    %c0_4 = arith.constant 0 : index
    %4 = vector.load %arg4[%c0_3, %c0_4] : memref<1x128xf32, #tpu.memory_space<vmem>>, vector<1x128xf32>
    %5 = vector.broadcast %4 : vector<1x128xf32> to vector<64x128xf32>
    %6 = arith.addf %3, %5 : vector<64x128xf32>
    %c0_5 = arith.constant 0 : index
    %c0_6 = arith.constant 0 : index
    %7 = vector.load %arg2[%c0_5, %c0_6] : memref<64x128xf32, #tpu.memory_space<vmem>>, vector<64x128xf32>
    %8 = arith.addf %6, %7 : vector<64x128xf32>
    %cst_7 = arith.constant dense<0.000000e+00> : vector<64xf32>
    %9 = vector.multi_reduction <add>, %8, %cst_7 [1] : vector<64x128xf32> to vector<64xf32>
    %10 = vector.shape_cast %9 : vector<64xf32> to vector<64x1xf32>
    %cst_8 = arith.constant 1.280000e+02 : f32
    %11 = vector.broadcast %cst_8 : f32 to vector<64x1xf32>
    %12 = arith.divf %10, %11 : vector<64x1xf32>
    %13 = arith.mulf %8, %8 : vector<64x128xf32>
    %cst_9 = arith.constant dense<0.000000e+00> : vector<64xf32>
    %14 = vector.multi_reduction <add>, %13, %cst_9 [1] : vector<64x128xf32> to vector<64xf32>
    %15 = vector.shape_cast %14 : vector<64xf32> to vector<64x1xf32>
    %cst_10 = arith.constant 1.280000e+02 : f32
    %16 = vector.broadcast %cst_10 : f32 to vector<64x1xf32>
    %17 = arith.divf %15, %16 : vector<64x1xf32>
    %18 = arith.mulf %12, %12 : vector<64x1xf32>
    %19 = arith.subf %17, %18 : vector<64x1xf32>
    %cst_11 = arith.constant 0.000000e+00 : f32
    %20 = vector.broadcast %cst_11 : f32 to vector<64x1xf32>
    %21 = arith.maximumf %19, %20 : vector<64x1xf32>
    %22 = vector.broadcast %12 : vector<64x1xf32> to vector<64x128xf32>
    %23 = arith.subf %8, %22 : vector<64x128xf32>
    %cst_12 = arith.constant 9.99999996E-13 : f32
    %24 = vector.broadcast %cst_12 : f32 to vector<64x1xf32>
    %25 = arith.addf %21, %24 : vector<64x1xf32>
    %26 = math.rsqrt %25 : vector<64x1xf32>
    %27 = vector.broadcast %26 : vector<64x1xf32> to vector<64x128xf32>
    %28 = arith.mulf %23, %27 : vector<64x128xf32>
    %c0_13 = arith.constant 0 : index
    %c0_14 = arith.constant 0 : index
    %29 = vector.load %arg5[%c0_13, %c0_14] : memref<1x128xf32, #tpu.memory_space<vmem>>, vector<1x128xf32>
    %30 = vector.broadcast %29 : vector<1x128xf32> to vector<64x128xf32>
    %31 = arith.mulf %28, %30 : vector<64x128xf32>
    %c0_15 = arith.constant 0 : index
    %c0_16 = arith.constant 0 : index
    %32 = vector.load %arg6[%c0_15, %c0_16] : memref<1x128xf32, #tpu.memory_space<vmem>>, vector<1x128xf32>
    %33 = vector.broadcast %32 : vector<1x128xf32> to vector<64x128xf32>
    %34 = arith.addf %31, %33 : vector<64x128xf32>
    %c0_17 = arith.constant 0 : index
    %c0_18 = arith.constant 0 : index
    %35 = vector.load %arg7[%c0_17, %c0_18] : memref<64x128xf32, #tpu.memory_space<vmem>>, vector<64x128xf32>
    tpu.vector_store %arg7[%c0_17, %c0_18], %34 {strides = array<i32>} : memref<64x128xf32, #tpu.memory_space<vmem>>, vector<64x128xf32>,
    return
  }
  func.func @transform_0(%arg0: i32) -> (i32, i32) {
    %c0_i32 = arith.constant 0 : i32
    %c0_i32_0 = arith.constant 0 : i32
    return %arg0, %c0_i32 : i32, i32
  }
  func.func @transform_1(%arg0: i32) -> (i32, i32) {
    %c0_i32 = arith.constant 0 : i32
    %c0_i32_0 = arith.constant 0 : i32
    return %arg0, %c0_i32 : i32, i32
  }
  func.func @transform_2(%arg0: i32) -> (i32, i32) {
    %c0_i32 = arith.constant 0 : i32
    %c0_i32_0 = arith.constant 0 : i32
    %c0_i32_1 = arith.constant 0 : i32
    return %c0_i32, %c0_i32_0 : i32, i32
  }
  func.func @transform_3(%arg0: i32) -> (i32, i32) {
    %c0_i32 = arith.constant 0 : i32
    %c0_i32_0 = arith.constant 0 : i32
    %c0_i32_1 = arith.constant 0 : i32
    return %c0_i32, %c0_i32_0 : i32, i32
  }
  func.func @transform_4(%arg0: i32) -> (i32, i32) {
    %c0_i32 = arith.constant 0 : i32
    %c0_i32_0 = arith.constant 0 : i32
    %c0_i32_1 = arith.constant 0 : i32
    return %c0_i32, %c0_i32_0 : i32, i32
  }
  func.func @transform_5(%arg0: i32) -> (i32, i32) {
    %c0_i32 = arith.constant 0 : i32
    %c0_i32_0 = arith.constant 0 : i32
    %c0_i32_1 = arith.constant 0 : i32
    return %c0_i32, %c0_i32_0 : i32, i32
  }
  func.func @transform_6(%arg0: i32) -> (i32, i32) {
    %c0_i32 = arith.constant 0 : i32
    %c0_i32_0 = arith.constant 0 : i32
    return %arg0, %c0_i32 : i32, i32
  }
}

</mosaic_0001>

<llo_original>
// kernel: tpu_custom_call.1
$region0: #{tpu_custom_call.1}
  #allocation0 [shape = 'u32[]', space=smem, size = 0x4, offset = 0x4, fixed_abs, tag = 'smem constant byte address 0x4 - core index']
  #allocation1 [shape = 'u32[144,128]{1,0:T(1,128)}', space=vmem, size = 0x12000, scoped, tag = 'internal scratch']
  %s0 = inlined_call_operand.hbm [shape: f32[128,128], index: 0, kind: input, shape index: {}]
  %s1 = inlined_call_operand.hbm [shape: f32[128,128], index: 1, kind: input, shape index: {}]
  %s2 = inlined_call_operand.hbm [shape: bf16[128,128], index: 2, kind: input, shape index: {}]
  %s3 = inlined_call_operand.vmem [shape: f32[1,128], index: 3, kind: input, shape index: {}]
  %s4 = inlined_call_operand.vmem [shape: f32[1,128], index: 4, kind: input, shape index: {}]
  %s5 = inlined_call_operand.vmem [shape: f32[1,128], index: 5, kind: input, shape index: {}]
  %s6 = inlined_call_operand.hbm [shape: f32[128,128], index: 6, kind: output, shape index: {}]
  %s7 = sld [smem:[#allocation0]]
  $region69: #{tpu_custom_call.1} parent=0
    _
  %s9 = ssub.s32 1, %s7
  %s10 = scalar_select 0, %s9, %s7
  $region1: #{tpu_custom_call.1} parent=0
    #allocation2 [shape = 'u8[65536]{0}', space=vmem, size = 0x10000, scoped, tag = 'input window, operand 0']
    #allocation3 [shape = 's32[2]{0}', space=sflag, size = 0x8, scoped, tag = 'scoped memory for tpu_custom_call.1']
    #allocation4 [shape = 's32[2]{0}', space=sflag, size = 0x8, scoped, tag = 'scoped memory for tpu_custom_call.1']
    #allocation5 [shape = 'u8[65536]{0}', space=vmem, size = 0x10000, scoped, tag = 'input window, operand 1']
    #allocation6 [shape = 's32[2]{0}', space=sflag, size = 0x8, scoped, tag = 'scoped memory for tpu_custom_call.1']
    #allocation7 [shape = 'u8[32768]{0}', space=vmem, size = 0x8000, scoped, tag = 'input window, operand 2, single buffered']
    #allocation8 [shape = 'u8[65536]{0}', space=vmem, size = 0x10000, scoped, tag = 'output window, operand 0']
    %11 = vsyncpa [#allocation3], 0
    %s12 = scalar_lea.sflag [#allocation3], 1
    %13 = vsyncpa %s12, 0
    %14 = vsyncpa [#allocation6], 0
    %s15 = scalar_lea.sflag [#allocation6], 1
    %16 = vsyncpa %s15, 0
    %17 = vsyncpa [#allocation4], 0
    %s18 = scalar_lea.sflag [#allocation4], 1
    %19 = vsyncpa %s18, 0
    loop: start=0, step=1, limit=4
    $region2: #{tpu_custom_call.1} parent=1 // loop_pre_header
      _
    $region3: #{tpu_custom_call.1} parent=1 // loop_header
      %s21 = sphi 0, %s25
      %p22 = scmp.ge.s32.totalorder %s21, 4
      %s31 = sphi 0, %s33
      %s34 = sphi 0, %s31
      %s35 = sphi 0, %s34
      %s51 = sphi 0, %s35
      %s57 = sphi 0, %s59
      %s60 = sphi 0, %s57
      %s61 = sphi 0, %s60
      %s77 = sphi 0, %s61
      %s81 = sphi 0, %s81
      %s83 = sphi 0, %s81
      %s84 = sphi 0, %s83
      %s98 = sphi 0, %s84
      %s102 = sphi 0, %s102
      %s104 = sphi 0, %s102
      %s105 = sphi 0, %s104
      %s119 = sphi 0, %s105
      %s123 = sphi 0, %s123
      %s125 = sphi 0, %s123
      %s126 = sphi 0, %s125
      %s140 = sphi 0, %s126
      %s144 = sphi 0, %s144
      %s146 = sphi 0, %s144
      %s147 = sphi 0, %s146
      %s161 = sphi 0, %s147
      %s167 = sphi 0, %s169
      %s170 = sphi 0, %s167
      %s171 = sphi 0, %s170
      %s187 = sphi 0, %s171
    $region4: #{tpu_custom_call.1} parent=1 // loop_header_branch
      %24 = sbr.rel (%p22) target = $region8
    $region5: #{tpu_custom_call.1} parent=1 // loop_body
      %s26 = ssub.s32 %s21, 1
      %s27 = ssub.s32 %s21, 2
      %s28 = sadd.s32 %s21, 1
      %s29 = ssub.s32 %s21, %s28
      %p30 = scmp.eq.s32.totalorder %s29, 0
      %s32 = sadd.s32 %s31, 1
      %s33 = scalar_select %p30, %s31, %s32
      %p36 = pneg %p30
      %p37 = scmp.eq.s32.totalorder %s21, 1
      %p38 = por %p36, %p37
      %p39 = scmp.ne.s32.totalorder %s31, %s34
      %p40 = scmp.eq.s32.totalorder %s21, 0
      %p41 = por %p39, %p40
      %p42 = scmp.ne.s32.totalorder %s31, %s34
      %p43 = scmp.eq.s32.totalorder %s26, 1
      %p44 = por %p42, %p43
      %p45 = scmp.ne.s32.totalorder %s34, %s35
      %p46 = scmp.eq.s32.totalorder %s26, 0
      %p47 = por %p45, %p46
      %p48 = scmp.ne.s32.totalorder %s34, %s35
      %p49 = scmp.eq.s32.totalorder %s27, 1
      %p50 = por %p48, %p49
      %p52 = scmp.ne.s32.totalorder %s35, %s51
      %p53 = scmp.eq.s32.totalorder %s27, 0
      %p54 = por %p52, %p53
      %s55 = ssub.s32 %s21, %s28
      %p56 = scmp.eq.s32.totalorder %s55, 0
      %s58 = sadd.s32 %s57, 1
      %s59 = scalar_select %p56, %s57, %s58
      %p62 = pneg %p56
      %p63 = scmp.eq.s32.totalorder %s21, 1
      %p64 = por %p62, %p63
      %p65 = scmp.ne.s32.totalorder %s57, %s60
      %p66 = scmp.eq.s32.totalorder %s21, 0
      %p67 = por %p65, %p66
      %p68 = scmp.ne.s32.totalorder %s57, %s60
      %p69 = scmp.eq.s32.totalorder %s26, 1
      %p70 = por %p68, %p69
      %p71 = scmp.ne.s32.totalorder %s60, %s61
      %p72 = scmp.eq.s32.totalorder %s26, 0
      %p73 = por %p71, %p72
      %p74 = scmp.ne.s32.totalorder %s60, %s61
      %p75 = scmp.eq.s32.totalorder %s27, 1
      %p76 = por %p74, %p75
      %p78 = scmp.ne.s32.totalorder %s61, %s77
      %p79 = scmp.eq.s32.totalorder %s27, 0
      %p80 = por %p78, %p79
      %s82 = sadd.s32 %s81, 1
      %p85 = scmp.eq.s32.totalorder %s21, 1
      %p86 = scmp.ne.s32.totalorder %s81, %s83
      %p87 = scmp.eq.s32.totalorder %s21, 0
      %p88 = por %p86, %p87
      %p89 = scmp.ne.s32.totalorder %s81, %s83
      %p90 = scmp.eq.s32.totalorder %s26, 1
      %p91 = por %p89, %p90
      %p92 = scmp.ne.s32.totalorder %s83, %s84
      %p93 = scmp.eq.s32.totalorder %s26, 0
      %p94 = por %p92, %p93
      %p95 = scmp.ne.s32.totalorder %s83, %s84
      %p96 = scmp.eq.s32.totalorder %s27, 1
      %p97 = por %p95, %p96
      %p99 = scmp.ne.s32.totalorder %s84, %s98
      %p100 = scmp.eq.s32.totalorder %s27, 0
      %p101 = por %p99, %p100
      %s103 = sadd.s32 %s102, 1
      %p106 = scmp.eq.s32.totalorder %s21, 1
      %p107 = scmp.ne.s32.totalorder %s102, %s104
      %p108 = scmp.eq.s32.totalorder %s21, 0
      %p109 = por %p107, %p108
      %p110 = scmp.ne.s32.totalorder %s102, %s104
      %p111 = scmp.eq.s32.totalorder %s26, 1
      %p112 = por %p110, %p111
      %p113 = scmp.ne.s32.totalorder %s104, %s105
      %p114 = scmp.eq.s32.totalorder %s26, 0
      %p115 = por %p113, %p114
      %p116 = scmp.ne.s32.totalorder %s104, %s105
      %p117 = scmp.eq.s32.totalorder %s27, 1
      %p118 = por %p116, %p117
      %p120 = scmp.ne.s32.totalorder %s105, %s119
      %p121 = scmp.eq.s32.totalorder %s27, 0
      %p122 = por %p120, %p121
      %s124 = sadd.s32 %s123, 1
      %p127 = scmp.eq.s32.totalorder %s21, 1
      %p128 = scmp.ne.s32.totalorder %s123, %s125
      %p129 = scmp.eq.s32.totalorder %s21, 0
      %p130 = por %p128, %p129
      %p131 = scmp.ne.s32.totalorder %s123, %s125
      %p132 = scmp.eq.s32.totalorder %s26, 1
      %p133 = por %p131, %p132
      %p134 = scmp.ne.s32.totalorder %s125, %s126
      %p135 = scmp.eq.s32.totalorder %s26, 0
      %p136 = por %p134, %p135
      %p137 = scmp.ne.s32.totalorder %s125, %s126
      %p138 = scmp.eq.s32.totalorder %s27, 1
      %p139 = por %p137, %p138
      %p141 = scmp.ne.s32.totalorder %s126, %s140
      %p142 = scmp.eq.s32.totalorder %s27, 0
      %p143 = por %p141, %p142
      %s145 = sadd.s32 %s144, 1
      %p148 = scmp.eq.s32.totalorder %s21, 1
      %p149 = scmp.ne.s32.totalorder %s144, %s146
      %p150 = scmp.eq.s32.totalorder %s21, 0
      %p151 = por %p149, %p150
      %p152 = scmp.ne.s32.totalorder %s144, %s146
      %p153 = scmp.eq.s32.totalorder %s26, 1
      %p154 = por %p152, %p153
      %p155 = scmp.ne.s32.totalorder %s146, %s147
      %p156 = scmp.eq.s32.totalorder %s26, 0
      %p157 = por %p155, %p156
      %p158 = scmp.ne.s32.totalorder %s146, %s147
      %p159 = scmp.eq.s32.totalorder %s27, 1
      %p160 = por %p158, %p159
      %p162 = scmp.ne.s32.totalorder %s147, %s161
      %p163 = scmp.eq.s32.totalorder %s27, 0
      %p164 = por %p162, %p163
      %s165 = ssub.s32 %s21, %s28
      %p166 = scmp.eq.s32.totalorder %s165, 0
      %s168 = sadd.s32 %s167, 1
      %s169 = scalar_select %p166, %s167, %s168
      %p172 = pneg %p166
      %p173 = scmp.eq.s32.totalorder %s21, 1
      %p174 = por %p172, %p173
      %p175 = scmp.ne.s32.totalorder %s167, %s170
      %p176 = scmp.eq.s32.totalorder %s21, 0
      %p177 = por %p175, %p176
      %p178 = scmp.ne.s32.totalorder %s167, %s170
      %p179 = scmp.eq.s32.totalorder %s26, 1
      %p180 = por %p178, %p179
      %p181 = scmp.ne.s32.totalorder %s170, %s171
      %p182 = scmp.eq.s32.totalorder %s26, 0
      %p183 = por %p181, %p182
      %p184 = scmp.ne.s32.totalorder %s170, %s171
      %p185 = scmp.eq.s32.totalorder %s27, 1
      %p186 = por %p184, %p185
      %p188 = scmp.ne.s32.totalorder %s171, %s187
      %p189 = scmp.eq.s32.totalorder %s27, 0
      %p190 = por %p188, %p189
      %p191 = scmp.le.s32.totalorder 1, %s21
      %p192 = scmp.lt.s32.totalorder %s21, 3
      %p193 = pnand %p191, %p192
      %p194 = pneg %p193
      // Predicated region
      $region9: #{tpu_custom_call.1} parent=5 // pred_check
        _
      $region10: #{tpu_custom_call.1} parent=5 // pred_check_branch
        %196 = sbr.rel (%p193) target = $region12
      $region11: #{tpu_custom_call.1} parent=5 // pred_region
        %s197 = ssub.s32 %s21, 1
        // Predicated region
        $region13: #{tpu_custom_call.1} parent=11 // pred_check
          %p198 = pneg %p94
        $region14: #{tpu_custom_call.1} parent=11 // pred_check_branch
          %200 = sbr.rel (%p198) target = $region16
        $region15: #{tpu_custom_call.1} parent=11 // pred_region
          %s202 = ssub.s32 1024, 1024
          %203 = vsyncadd [#allocation6], %s202
          %s204 = sshll.u32 [#allocation7], 4
          %s205 = int_to_ptr.vmem [resolvable:$true] %s204
          %210 = dma.hbm_to_vmem [thread:$0]  %s2, 1024, %s205, [#allocation6], 64, 64, 4
        $region16: #{tpu_custom_call.1} parent=11 // pred_fallthru
          _
        // Predicated region
        $region17: #{tpu_custom_call.1} parent=11 // pred_check
          %p211 = pneg %p115
        $region18: #{tpu_custom_call.1} parent=11 // pred_check_branch
          %213 = sbr.rel (%p211) target = $region20
        $region19: #{tpu_custom_call.1} parent=11 // pred_region
          _
        $region20: #{tpu_custom_call.1} parent=11 // pred_fallthru
          _
        // Predicated region
        $region21: #{tpu_custom_call.1} parent=11 // pred_check
          %p214 = pneg %p136
        $region22: #{tpu_custom_call.1} parent=11 // pred_check_branch
          %216 = sbr.rel (%p214) target = $region24
        $region23: #{tpu_custom_call.1} parent=11 // pred_region
          _
        $region24: #{tpu_custom_call.1} parent=11 // pred_fallthru
          _
        // Predicated region
        $region25: #{tpu_custom_call.1} parent=11 // pred_check
          %p217 = pneg %p157
        $region26: #{tpu_custom_call.1} parent=11 // pred_check_branch
          %219 = sbr.rel (%p217) target = $region28
        $region27: #{tpu_custom_call.1} parent=11 // pred_region
          _
        $region28: #{tpu_custom_call.1} parent=11 // pred_fallthru
          _
      $region12: #{tpu_custom_call.1} parent=5 // pred_fallthru
        _
      %p220 = scmp.lt.s32.totalorder %s21, 2
      // Predicated region
      $region29: #{tpu_custom_call.1} parent=5 // pred_check
        %p221 = pneg %p220
      $region30: #{tpu_custom_call.1} parent=5 // pred_check_branch
        %223 = sbr.rel (%p221) target = $region32
      $region31: #{tpu_custom_call.1} parent=5 // pred_region
        // Predicated region
        $region33: #{tpu_custom_call.1} parent=31 // pred_check
          %p224 = pneg %p41
        $region34: #{tpu_custom_call.1} parent=31 // pred_check_branch
          %226 = sbr.rel (%p224) target = $region36
        $region35: #{tpu_custom_call.1} parent=31 // pred_region
          %s227 = sand.u32 %s31, 1
          %s228 = scalar_lea.sflag [#allocation3], %s227
          %s229 = sand.u32 %s31, 1
          %s230 = smul.addr %s229, 64
          %s231 = scalar_lea.vmem [#allocation2], %s230
          %s232 = smul.u32 8, %s21
          %s234 = ssub.s32 1024, 1024
          %235 = vsyncadd %s228, %s234
          %s236 = smul.addr %s232, 128
          %s237 = scalar_lea.hbm %s0, %s236
          %s238 = sshll.u32 %s231, 4
          %s239 = int_to_ptr.vmem [resolvable:$true] %s238
          %244 = dma.hbm_to_vmem [thread:$0]  %s237, 1024, %s239, %s228, 128, 128, 8
        $region36: #{tpu_custom_call.1} parent=31 // pred_fallthru
          _
        // Predicated region
        $region37: #{tpu_custom_call.1} parent=31 // pred_check
          %p245 = pneg %p67
        $region38: #{tpu_custom_call.1} parent=31 // pred_check_branch
          %247 = sbr.rel (%p245) target = $region40
        $region39: #{tpu_custom_call.1} parent=31 // pred_region
          %s248 = sand.u32 %s21, 1
          %s249 = scalar_lea.sflag [#allocation6], %s248
          %s250 = sand.u32 %s57, 1
          %s251 = smul.addr %s250, 64
          %s252 = scalar_lea.vmem [#allocation5], %s251
          %s253 = smul.u32 8, %s21
          %s255 = ssub.s32 1024, 1024
          %256 = vsyncadd %s249, %s255
          %s257 = smul.addr %s253, 128
          %s258 = scalar_lea.hbm %s1, %s257
          %s259 = sshll.u32 %s252, 4
          %s260 = int_to_ptr.vmem [resolvable:$true] %s259
          %265 = dma.hbm_to_vmem [thread:$0]  %s258, 1024, %s260, %s249, 128, 128, 8
        $region40: #{tpu_custom_call.1} parent=31 // pred_fallthru
          _
      $region32: #{tpu_custom_call.1} parent=5 // pred_fallthru
        _
      %p266 = scmp.le.s32.totalorder 1, %s21
      %p267 = scmp.lt.s32.totalorder %s21, 3
      %p268 = pnand %p266, %p267
      %p269 = pneg %p268
      // Predicated region
      $region41: #{tpu_custom_call.1} parent=5 // pred_check
        _
      $region42: #{tpu_custom_call.1} parent=5 // pred_check_branch
        %271 = sbr.rel (%p268) target = $region44
      $region43: #{tpu_custom_call.1} parent=5 // pred_region
        %s272 = ssub.s32 %s21, 1
        %s273 = sand.u32 %s34, 1
        %s274 = scalar_lea.sflag [#allocation3], %s273
        %s275 = sand.u32 %s34, 1
        %s276 = smul.addr %s275, 64
        %s277 = scalar_lea.vmem [#allocation2], %s276
        // Predicated region
        $region45: #{tpu_custom_call.1} parent=43 // pred_check
          %p278 = pneg %p47
        $region46: #{tpu_custom_call.1} parent=43 // pred_check_branch
          %280 = sbr.rel (%p278) target = $region48
        $region47: #{tpu_custom_call.1} parent=43 // pred_region
          %281 = dma.done %s274, 1024
        $region48: #{tpu_custom_call.1} parent=43 // pred_fallthru
          _
        %s282 = sand.u32 %s26, 1
        %s283 = scalar_lea.sflag [#allocation6], %s282
        %s284 = sand.u32 %s60, 1
        %s285 = smul.addr %s284, 64
        %s286 = scalar_lea.vmem [#allocation5], %s285
        // Predicated region
        $region49: #{tpu_custom_call.1} parent=43 // pred_check
          %p287 = pneg %p73
        $region50: #{tpu_custom_call.1} parent=43 // pred_check_branch
          %289 = sbr.rel (%p287) target = $region52
        $region51: #{tpu_custom_call.1} parent=43 // pred_region
          %290 = dma.done %s283, 1024
        $region52: #{tpu_custom_call.1} parent=43 // pred_fallthru
          _
        // Predicated region
        $region53: #{tpu_custom_call.1} parent=43 // pred_check
          %p291 = pneg %p94
        $region54: #{tpu_custom_call.1} parent=43 // pred_check_branch
          %293 = sbr.rel (%p291) target = $region56
        $region55: #{tpu_custom_call.1} parent=43 // pred_region
          %294 = dma.done [#allocation6], 1024
        $region56: #{tpu_custom_call.1} parent=43 // pred_fallthru
          _
        %s295 = sand.u32 %s34, 1
        %s296 = scalar_lea.sflag [#allocation3], %s295
        %s297 = sand.u32 %s34, 1
        %s298 = smul.addr %s297, 64
        %s299 = scalar_lea.vmem [#allocation2], %s298
        %p300 = pneg %p47
        %p301 = pneg %p44
        %s302 = sand.u32 %s26, 1
        %s303 = scalar_lea.sflag [#allocation6], %s302
        %s304 = sand.u32 %s60, 1
        %s305 = smul.addr %s304, 64
        %s306 = scalar_lea.vmem [#allocation5], %s305
        %p307 = pneg %p73
        %p308 = pneg %p70
        %p309 = pneg %p94
        %p310 = pneg %p91
        %p311 = pneg %p115
        %p312 = pneg %p112
        %p313 = pneg %p136
        %p314 = pneg %p133
        %p315 = pneg %p157
        %p316 = pneg %p154
        %p317 = pneg %p183
        %p318 = pneg %p180
        %s319 = sand.u32 %s170, 1
        %s320 = scalar_lea.sflag [#allocation4], %s319
        %s321 = sand.u32 %s170, 1
        %s322 = smul.addr %s321, 64
        %s323 = scalar_lea.vmem [#allocation8], %s322
        %s324 = smul.u32 8, %s26
        %s325 = smul.u32 8, %s26
        %s326 = smul.u32 8, %s26
        %v328 = vld [vmem:[#allocation7] sm:$0xf]
        %v329 = vld [vmem:[#allocation7 + $0x4] sm:$0xf]
        %v330 = vld [vmem:[#allocation7 + $0x8] sm:$0xf]
        %v331 = vld [vmem:[#allocation7 + $0xc] sm:$0xf]
        %v332 = vld [vmem:[#allocation7 + $0x10] sm:$0xf]
        %v333 = vld [vmem:[#allocation7 + $0x14] sm:$0xf]
        %v334 = vld [vmem:[#allocation7 + $0x18] sm:$0xf]
        %v335 = vld [vmem:[#allocation7 + $0x1c] sm:$0xf]
        %v336 = vld [vmem:[#allocation7 + $0x20] sm:$0xf]
        %v337 = vld [vmem:[#allocation7 + $0x24] sm:$0xf]
        %v338 = vld [vmem:[#allocation7 + $0x28] sm:$0xf]
        %v339 = vld [vmem:[#allocation7 + $0x2c] sm:$0xf]
        %v340 = vld [vmem:[#allocation7 + $0x30] sm:$0xf]
        %v341 = vld [vmem:[#allocation7 + $0x34] sm:$0xf]
        %v342 = vld [vmem:[#allocation7 + $0x38] sm:$0xf]
        %v343 = vld [vmem:[#allocation7 + $0x3c] sm:$0xf]
        %v344 = vld [vmem:[%s277] sm:$0xff]
        %v345 = vld [vmem:[%s277 + $0x8] sm:$0xff]
        %v346 = vld [vmem:[%s277 + $0x10] sm:$0xff]
        %v347 = vld [vmem:[%s277 + $0x18] sm:$0xff]
        %v348 = vld [vmem:[%s277 + $0x20] sm:$0xff]
        %v349 = vld [vmem:[%s277 + $0x28] sm:$0xff]
        %v350 = vld [vmem:[%s277 + $0x30] sm:$0xff]
        %v351 = vld [vmem:[%s277 + $0x38] sm:$0xff]
        %v352 = vpack.c.bf16 %v345, %v344
        %v353 = vpack.c.bf16 %v347, %v346
        %v354 = vpack.c.bf16 %v349, %v348
        %v355 = vpack.c.bf16 %v351, %v350
        %v356 = vld [vmem:[%s3] sm:$0x1]
        %v358 = vlaneseq
        %v359 = vshrl.u32 %v358, 7
        %v360 = vsub.s32 0, %v359
        %v361 = vrot.slane %v356, %v360
        %v379 = vunpack.c.l.b16 %v328
        %v380 = vunpack.c.l.b16 %v329
        %v381 = vunpack.c.l.b16 %v330
        %v382 = vunpack.c.l.b16 %v331
        %v383 = vunpack.c.l.b16 %v332
        %v384 = vunpack.c.l.b16 %v333
        %v385 = vunpack.c.l.b16 %v334
        %v386 = vunpack.c.l.b16 %v335
        %v387 = vunpack.c.l.b16 %v336
        %v388 = vunpack.c.l.b16 %v337
        %v389 = vunpack.c.l.b16 %v338
        %v390 = vunpack.c.l.b16 %v339
        %v391 = vunpack.c.l.b16 %v340
        %v392 = vunpack.c.l.b16 %v341
        %v393 = vunpack.c.l.b16 %v342
        %v394 = vunpack.c.l.b16 %v343
        %v395 = vpack.c.b16 %v380, %v379
        %v396 = vpack.c.b16 %v382, %v381
        %v397 = vpack.c.b16 %v384, %v383
        %v398 = vpack.c.b16 %v386, %v385
        %v399 = vpack.c.b16 %v388, %v387
        %v400 = vpack.c.b16 %v390, %v389
        %v401 = vpack.c.b16 %v392, %v391
        %v402 = vpack.c.b16 %v394, %v393
        %411 = vmatprep.subr.bf16.mxu0 0
        %412 = vmatpush1.bf16.msra.mxu0 %v395
        %413 = vmatprep.subr.bf16.mxu0 0
        %414 = vmatpush1.bf16.msra.mxu0 %v396
        %415 = vmatprep.subr.bf16.mxu0 0
        %416 = vmatpush1.bf16.msra.mxu0 %v397
        %417 = vmatprep.subr.bf16.mxu0 0
        %418 = vmatpush1.bf16.msra.mxu0 %v398
        %419 = vmatprep.subr.bf16.mxu0 0
        %420 = vmatpush1.bf16.msra.mxu0 %v399
        %421 = vmatprep.subr.bf16.mxu0 0
        %422 = vmatpush1.bf16.msra.mxu0 %v400
        %423 = vmatprep.subr.bf16.mxu0 0
        %424 = vmatpush1.bf16.msra.mxu0 %v401
        %425 = vmatprep.subr.bf16.mxu0 0
        %426 = vmatpush1.bf16.msra.mxu0 %v402
        %427 = vmatprep.subr.bf16.mxu0 0
        %428 = vmatpush1.bf16.msra.mxu0 0
        %429 = vmatprep.subr.bf16.mxu0 0
        %430 = vmatpush1.bf16.msra.mxu0 0
        %431 = vmatprep.subr.bf16.mxu0 0
        %432 = vmatpush1.bf16.msra.mxu0 0
        %433 = vmatprep.subr.bf16.mxu0 0
        %434 = vmatpush1.bf16.msra.mxu0 0
        %435 = vmatprep.subr.bf16.mxu0 0
        %436 = vmatpush1.bf16.msra.mxu0 0
        %437 = vmatprep.subr.bf16.mxu0 0
        %438 = vmatpush1.bf16.msra.mxu0 0
        %439 = vmatprep.subr.bf16.mxu0 0
        %440 = vmatpush1.bf16.msra.mxu0 0
        %441 = vmatprep.subr.bf16.mxu0 0
        %442 = vmatpush1.bf16.msra.mxu0 0
        %443 = vmatprep.mubr.bf16.mxu0 0
        %444 = vmatmul.mubr.bf16.gmra.mrb[0].mxu0 %v352
        %v445 = vpop.f32.mrb[0].mxu0
        %v446 = vadd.f32 %v361, %v445
        %v447 = vpop.f32.mrb[0].mxu0
        %v448 = vpop.f32.mrb[0].mxu0
        %v449 = vadd.f32 %v361, %v448
        %v450 = vpop.f32.mrb[0].mxu0
        %451 = vmatprep.mubr.bf16.mxu0 0
        %452 = vmatmul.mubr.bf16.gmra.mrb[0].mxu0 %v353
        %v453 = vpop.f32.mrb[0].mxu0
        %v454 = vadd.f32 %v361, %v453
        %v455 = vpop.f32.mrb[0].mxu0
        %v456 = vpop.f32.mrb[0].mxu0
        %v457 = vadd.f32 %v361, %v456
        %v458 = vpop.f32.mrb[0].mxu0
        %459 = vmatprep.mubr.bf16.mxu0 0
        %460 = vmatmul.mubr.bf16.gmra.mrb[0].mxu0 %v354
        %v461 = vpop.f32.mrb[0].mxu0
        %v462 = vadd.f32 %v361, %v461
        %v463 = vpop.f32.mrb[0].mxu0
        %v464 = vpop.f32.mrb[0].mxu0
        %v465 = vadd.f32 %v361, %v464
        %v466 = vpop.f32.mrb[0].mxu0
        %467 = vmatprep.mubr.bf16.mxu0 0
        %468 = vmatmul.mubr.bf16.gmra.mrb[0].mxu0 %v355
        %v469 = vpop.f32.mrb[0].mxu0
        %v470 = vadd.f32 %v361, %v469
        %v471 = vpop.f32.mrb[0].mxu0
        %v472 = vpop.f32.mrb[0].mxu0
        %v473 = vadd.f32 %v361, %v472
        %v474 = vpop.f32.mrb[0].mxu0
        %475 = vdwg.mxu0
        %v476 = vld [vmem:[%s286] sm:$0xff]
        %v477 = vld [vmem:[%s286 + $0x8] sm:$0xff]
        %v478 = vld [vmem:[%s286 + $0x10] sm:$0xff]
        %v479 = vld [vmem:[%s286 + $0x18] sm:$0xff]
        %v480 = vld [vmem:[%s286 + $0x20] sm:$0xff]
        %v481 = vld [vmem:[%s286 + $0x28] sm:$0xff]
        %v482 = vld [vmem:[%s286 + $0x30] sm:$0xff]
        %v483 = vld [vmem:[%s286 + $0x38] sm:$0xff]
        %v484 = vadd.f32 %v446, %v476
        %v485 = vadd.f32 %v449, %v477
        %v486 = vadd.f32 %v454, %v478
        %v487 = vadd.f32 %v457, %v479
        %v488 = vadd.f32 %v462, %v480
        %v489 = vadd.f32 %v465, %v481
        %v490 = vadd.f32 %v470, %v482
        %v491 = vadd.f32 %v473, %v483
        %492 = vadd.xlane.f32.xlu0 %v484
        %v493 = vpop.xlane.xlu0 %492
        %494 = vadd.xlane.f32.xlu0 %v485
        %v495 = vpop.xlane.xlu0 %494
        %496 = vadd.xlane.f32.xlu0 %v486
        %v497 = vpop.xlane.xlu0 %496
        %498 = vadd.xlane.f32.xlu0 %v487
        %v499 = vpop.xlane.xlu0 %498
        %500 = vadd.xlane.f32.xlu0 %v488
        %v501 = vpop.xlane.xlu0 %500
        %502 = vadd.xlane.f32.xlu0 %v489
        %v503 = vpop.xlane.xlu0 %502
        %504 = vadd.xlane.f32.xlu0 %v490
        %v505 = vpop.xlane.xlu0 %504
        %506 = vadd.xlane.f32.xlu0 %v491
        %v507 = vpop.xlane.xlu0 %506
        %v508 = vrcp.pop 128.0
        %v509 = vmul.f32 %v493, %v508
        %v510 = vmul.f32 %v495, %v508
        %v511 = vmul.f32 %v497, %v508
        %v512 = vmul.f32 %v499, %v508
        %v513 = vmul.f32 %v501, %v508
        %v514 = vmul.f32 %v503, %v508
        %v515 = vmul.f32 %v505, %v508
        %v516 = vmul.f32 %v507, %v508
        %v517 = vmul.f32 %v484, %v484
        %v518 = vmul.f32 %v485, %v485
        %v519 = vmul.f32 %v486, %v486
        %v520 = vmul.f32 %v487, %v487
        %v521 = vmul.f32 %v488, %v488
        %v522 = vmul.f32 %v489, %v489
        %v523 = vmul.f32 %v490, %v490
        %v524 = vmul.f32 %v491, %v491
        %525 = vadd.xlane.f32.xlu0 %v517
        %v526 = vpop.xlane.xlu0 %525
        %527 = vadd.xlane.f32.xlu0 %v518
        %v528 = vpop.xlane.xlu0 %527
        %529 = vadd.xlane.f32.xlu0 %v519
        %v530 = vpop.xlane.xlu0 %529
        %531 = vadd.xlane.f32.xlu0 %v520
        %v532 = vpop.xlane.xlu0 %531
        %533 = vadd.xlane.f32.xlu0 %v521
        %v534 = vpop.xlane.xlu0 %533
        %535 = vadd.xlane.f32.xlu0 %v522
        %v536 = vpop.xlane.xlu0 %535
        %537 = vadd.xlane.f32.xlu0 %v523
        %v538 = vpop.xlane.xlu0 %537
        %539 = vadd.xlane.f32.xlu0 %v524
        %v540 = vpop.xlane.xlu0 %539
        %v541 = vmul.f32 %v526, %v508
        %v542 = vmul.f32 %v528, %v508
        %v543 = vmul.f32 %v530, %v508
        %v544 = vmul.f32 %v532, %v508
        %v545 = vmul.f32 %v534, %v508
        %v546 = vmul.f32 %v536, %v508
        %v547 = vmul.f32 %v538, %v508
        %v548 = vmul.f32 %v540, %v508
        %v549 = vmul.f32 %v509, %v509
        %v550 = vmul.f32 %v510, %v510
        %v551 = vmul.f32 %v511, %v511
        %v552 = vmul.f32 %v512, %v512
        %v553 = vmul.f32 %v513, %v513
        %v554 = vmul.f32 %v514, %v514
        %v555 = vmul.f32 %v515, %v515
        %v556 = vmul.f32 %v516, %v516
        %v557 = vsub.f32 %v541, %v549
        %v558 = vsub.f32 %v542, %v550
        %v559 = vsub.f32 %v543, %v551
        %v560 = vsub.f32 %v544, %v552
        %v561 = vsub.f32 %v545, %v553
        %v562 = vsub.f32 %v546, %v554
        %v563 = vsub.f32 %v547, %v555
        %v564 = vsub.f32 %v548, %v556
        %v565 = vmax.f32 %v557, 0.0
        %v566 = vmax.f32 %v558, 0.0
        %v567 = vmax.f32 %v559, 0.0
        %v568 = vmax.f32 %v560, 0.0
        %v569 = vmax.f32 %v561, 0.0
        %v570 = vmax.f32 %v562, 0.0
        %v571 = vmax.f32 %v563, 0.0
        %v572 = vmax.f32 %v564, 0.0
        %v573 = vsub.f32 %v484, %v509
        %v574 = vsub.f32 %v485, %v510
        %v575 = vsub.f32 %v486, %v511
        %v576 = vsub.f32 %v487, %v512
        %v577 = vsub.f32 %v488, %v513
        %v578 = vsub.f32 %v489, %v514
        %v579 = vsub.f32 %v490, %v515
        %v580 = vsub.f32 %v491, %v516
        %v581 = vadd.f32 %v565, 1e-12
        %v582 = vadd.f32 %v566, 1e-12
        %v583 = vadd.f32 %v567, 1e-12
        %v584 = vadd.f32 %v568, 1e-12
        %v585 = vadd.f32 %v569, 1e-12
        %v586 = vadd.f32 %v570, 1e-12
        %v587 = vadd.f32 %v571, 1e-12
        %v588 = vadd.f32 %v572, 1e-12
        %v589 = vrsqrt.pop %v581
        %v590 = vrsqrt.pop %v582
        %v591 = vrsqrt.pop %v583
        %v592 = vrsqrt.pop %v584
        %v593 = vrsqrt.pop %v585
        %v594 = vrsqrt.pop %v586
        %v595 = vrsqrt.pop %v587
        %v596 = vrsqrt.pop %v588
        %v597 = vmul.f32 %v573, %v589
        %v598 = vmul.f32 %v574, %v590
        %v599 = vmul.f32 %v575, %v591
        %v600 = vmul.f32 %v576, %v592
        %v601 = vmul.f32 %v577, %v593
        %v602 = vmul.f32 %v578, %v594
        %v603 = vmul.f32 %v579, %v595
        %v604 = vmul.f32 %v580, %v596
        %v605 = vld [vmem:[%s4] sm:$0x1]
        %v607 = vlaneseq
        %v608 = vshrl.u32 %v607, 7
        %v609 = vsub.s32 0, %v608
        %v610 = vrot.slane %v605, %v609
        %v612 = vmul.f32 %v597, %v610
        %v613 = vmul.f32 %v598, %v610
        %v614 = vmul.f32 %v599, %v610
        %v615 = vmul.f32 %v600, %v610
        %v616 = vmul.f32 %v601, %v610
        %v617 = vmul.f32 %v602, %v610
        %v618 = vmul.f32 %v603, %v610
        %v619 = vmul.f32 %v604, %v610
        %v620 = vld [vmem:[%s5] sm:$0x1]
        %v622 = vlaneseq
        %v623 = vshrl.u32 %v622, 7
        %v624 = vsub.s32 0, %v623
        %v625 = vrot.slane %v620, %v624
        %v627 = vadd.f32 %v612, %v625
        %v628 = vadd.f32 %v613, %v625
        %v629 = vadd.f32 %v614, %v625
        %v630 = vadd.f32 %v615, %v625
        %v631 = vadd.f32 %v616, %v625
        %v632 = vadd.f32 %v617, %v625
        %v633 = vadd.f32 %v618, %v625
        %v634 = vadd.f32 %v619, %v625
        %635 = vst [vmem:[%s323] sm:$0xff] %v627
        %636 = vst [vmem:[%s323 + $0x8] sm:$0xff] %v628
        %637 = vst [vmem:[%s323 + $0x10] sm:$0xff] %v629
        %638 = vst [vmem:[%s323 + $0x18] sm:$0xff] %v630
        %639 = vst [vmem:[%s323 + $0x20] sm:$0xff] %v631
        %640 = vst [vmem:[%s323 + $0x28] sm:$0xff] %v632
        %641 = vst [vmem:[%s323 + $0x30] sm:$0xff] %v633
        %642 = vst [vmem:[%s323 + $0x38] sm:$0xff] %v634
        %s643 = sand.u32 %s170, 1
        %s644 = scalar_lea.sflag [#allocation4], %s643
        %s645 = sand.u32 %s170, 1
        %s646 = smul.addr %s645, 64
        %s647 = scalar_lea.vmem [#allocation8], %s646
        // Predicated region
        $region57: #{tpu_custom_call.1} parent=43 // pred_check
          %p648 = pneg %p180
        $region58: #{tpu_custom_call.1} parent=43 // pred_check_branch
          %650 = sbr.rel (%p648) target = $region60
        $region59: #{tpu_custom_call.1} parent=43 // pred_region
          %s651 = smul.u32 8, %s26
          %s653 = ssub.s32 1024, 1024
          %654 = vsyncadd %s644, %s653
          %s655 = smul.addr %s651, 128
          %s656 = scalar_lea.hbm %s6, %s655
          %s657 = sshll.u32 %s647, 4
          %s658 = int_to_ptr.vmem [resolvable:$true] %s657
          %663 = dma.vmem_to_hbm [thread:$0]  %s658, 1024, %s656, %s644, 128, 128, 8
        $region60: #{tpu_custom_call.1} parent=43 // pred_fallthru
          _
      $region44: #{tpu_custom_call.1} parent=5 // pred_fallthru
        _
      %p664 = scmp.le.s32.totalorder 2, %s21
      // Predicated region
      $region61: #{tpu_custom_call.1} parent=5 // pred_check
        %p665 = pneg %p664
      $region62: #{tpu_custom_call.1} parent=5 // pred_check_branch
        %667 = sbr.rel (%p665) target = $region64
      $region63: #{tpu_custom_call.1} parent=5 // pred_region
        %s668 = ssub.s32 %s21, 2
        // Predicated region
        $region65: #{tpu_custom_call.1} parent=63 // pred_check
          %p669 = pneg %p186
        $region66: #{tpu_custom_call.1} parent=63 // pred_check_branch
          %671 = sbr.rel (%p669) target = $region68
        $region67: #{tpu_custom_call.1} parent=63 // pred_region
          %s672 = sand.u32 %s171, 1
          %s673 = scalar_lea.sflag [#allocation4], %s672
          %s674 = sand.u32 %s171, 1
          %s675 = smul.addr %s674, 64
          %s676 = scalar_lea.vmem [#allocation8], %s675
          %677 = dma.done %s673, 1024
        $region68: #{tpu_custom_call.1} parent=63 // pred_fallthru
          _
      $region64: #{tpu_custom_call.1} parent=5 // pred_fallthru
        _
    $region6: #{tpu_custom_call.1} parent=1 // loop_footer
      %s25 = sadd.s32 1, %s21
    $region7: #{tpu_custom_call.1} parent=1 // loop_footer_branch
      %20 = sbr.rel target = $region3
    $region8: #{tpu_custom_call.1} parent=1 // loop_exit
      _
    %678 = vsyncpa [#allocation3], 1
    %s679 = scalar_lea.sflag [#allocation3], 1
    %680 = vsyncpa %s679, 1
    %681 = vsyncpa [#allocation6], 1
    %s682 = scalar_lea.sflag [#allocation6], 1
    %683 = vsyncpa %s682, 1
    %684 = vsyncpa [#allocation4], 1
    %s685 = scalar_lea.sflag [#allocation4], 1
    %686 = vsyncpa %s685, 1

</llo_original>
